<compile_context>
chip_gen: v6e
topology: v6e:2x2x1
jax: 0.10.0
libtpu: 0.0.40
codegen_flags: <defaults>
</compile_context>

<pallas_src>
import math

import jax
import jax.numpy as jnp
import numpy as np
from jax import lax
from jax.experimental import pallas as pl
from jax.experimental.pallas import tpu as pltpu

# ------------- hyper-parameters (mirror SogCLR_Penalty.__init__ defaults) ----
N_BUFFER = 2048          # module default is 10_000_000; shrunk for synthetic test
NUM_CT_CLASS = 5
GAMMA1 = 0.8
GAMMA2 = 0.8
TEMPERATURE = 0.07
BETA = 40.0
TAU = 0.1
TOTAL_EPOCH = 40
COSINE = False
ENABLE_SURROGATE = False
SURROGATE_C = 1.0
EPS = float(jnp.finfo(jnp.float32).eps)

# TODO(synk): gather_features (world_size > 1 distributed all-gather) is not
# implemented; single-device path only.


def _round_up(x, m):
    return ((x + m - 1) // m) * m


# -----------------------------------------------------------------------------
# Shared per-tile math.
#   sim   : raw (tq, tk) similarity tile (MXU, f32 accumulation)
#   dps_* : diag * pos            (diag correction only on positive rows/cols)
#   pos_* : positive mask
#   negs_*: negative mask * (1/temperature)   <- 1/T folded in here, so
#       m   = mask / T
#       arg = masked diffs / T          (exactly the exp argument)
#       em  = exp(diffs/T) * mask / T
#       g   = exp(diffs/T) * diffs * mask / T
#   The wrapper multiplies the reductions back by T.  Padded rows/cols have
#   pos = negs = 0 and therefore contribute nothing.
# -----------------------------------------------------------------------------
def _tile_terms(sim, dps_i, pos_i, negs_i, dps_j, pos_j, negs_j):
    m = pos_i * negs_j + negs_i * pos_j              # (tq, tk), disjoint masks
    d = (sim - dps_i) - dps_j                        # diffs on the masked region
    if ENABLE_SURROGATE:
        d = jnp.maximum(d + SURROGATE_C, 0.0)
        d = d * d
    arg = d * m
    e = jnp.exp(arg)                                 # EUP
    em = e * m
    g = e * arg
    a_blk = jnp.sum(em, axis=1, keepdims=True)       # (tq, 1)  image side
    b_blk = jnp.sum(g, axis=1, keepdims=True)        # (tq, 1)
    c_blk = jnp.sum(em, axis=0, keepdims=True)       # (1, tk)  text side
    d_blk = jnp.sum(g, axis=0, keepdims=True)        # (1, tk)
    return a_blk, b_blk, c_blk, d_blk


# -------- primary kernel: 1-D grid over row tiles, text block VMEM-resident --
def _resident_kernel(img_ref, txt_ref, dps_i_ref, pos_i_ref, negs_i_ref,
                     dps_j_ref, pos_j_ref, negs_j_ref,
                     a_ref, b_ref, c_ref, d_ref):
    sim = lax.dot_general(img_ref[...], txt_ref[...],
                          (((1,), (1,)), ((), ())),
                          preferred_element_type=jnp.float32)      # (tq, Bp)
    a_blk, b_blk, c_blk, d_blk = _tile_terms(
        sim, dps_i_ref[...], pos_i_ref[...], negs_i_ref[...],
        dps_j_ref[...], pos_j_ref[...], negs_j_ref[...])
    a_ref[...] = a_blk
    b_ref[...] = b_blk
    c_ref[...] = c_blk.reshape(c_ref.shape)
    d_ref[...] = d_blk.reshape(d_ref.shape)


# -------- fallback kernel: 2-D grid, text streamed in column tiles -----------
def _stream_kernel(img_ref, txt_ref, dps_i_ref, pos_i_ref, negs_i_ref,
                   dps_j_ref, pos_j_ref, negs_j_ref,
                   a_ref, b_ref, c_ref, d_ref):
    ki = pl.program_id(1)
    sim = lax.dot_general(img_ref[...], txt_ref[...],
                          (((1,), (1,)), ((), ())),
                          preferred_element_type=jnp.float32)      # (tq, tk)
    a_blk, b_blk, c_blk, d_blk = _tile_terms(
        sim, dps_i_ref[...], pos_i_ref[...], negs_i_ref[...],
        dps_j_ref[...], pos_j_ref[...], negs_j_ref[...])

    @pl.when(ki == 0)
    def _():
        a_ref[...] = jnp.zeros_like(a_ref)
        b_ref[...] = jnp.zeros_like(b_ref)

    a_ref[...] += a_blk
    b_ref[...] += b_blk
    # Column partials are tiny lane-dense (1,1,tk) blocks written once per step.
    c_ref[...] = c_blk.reshape(c_ref.shape)
    d_ref[...] = d_blk.reshape(d_ref.shape)


# -----------------------------------------------------------------------------
# Tiled contrastive reduction.  Returns length-B f32 vectors
#   a[i] = sum_{j in neg} exp(diff_img[i,j]/T)   (valid for positive rows i)
#   b[i] = sum_{j in neg} exp(diff_img[i,j]/T) * diff_img[i,j]
#   c[j] = sum_{i in neg} exp(diff_txt[i,j]/T)   (valid for positive cols j)
#   d[j] = sum_{i in neg} exp(diff_txt[i,j]/T) * diff_txt[i,j]
# -----------------------------------------------------------------------------
def _contrastive_sums(image_features, text_features, pos, diag, *,
                      force_stream=False, row_tile=None, col_tile=None):
    f32 = jnp.float32
    B, D = image_features.shape
    esz = image_features.dtype.itemsize

    # -------- tile selection & batch padding ---------------------------------
    if row_tile is not None:
        tq = row_tile
    elif B <= 256:
        tq = _round_up(B, 8)
    else:
        tq = 256
    resident = (not force_stream) and (
        _round_up(B, tq) * D * esz <= 8 * 1024 * 1024)
    if resident:
        Bp = _round_up(B, tq)
        tk = Bp
        n_ct = 1
    else:
        tk = col_tile if col_tile is not None else 512
        Bp = _round_up(B, max(tq, tk))
        n_ct = Bp // tk
    n_rt = Bp // tq

    pad = Bp - B
    if pad:
        image_features = jnp.pad(image_features, ((0, pad), (0, 0)))
        text_features = jnp.pad(text_features, ((0, pad), (0, 0)))
        pos = jnp.pad(pos, (0, pad))
        diag = jnp.pad(diag, (0, pad))
        valid = jnp.pad(jnp.ones((B,), f32), (0, pad))
    else:
        valid = jnp.ones((B,), f32)

    inv_t = f32(1.0 / TEMPERATURE)
    negs = (valid - pos) * inv_t          # negative mask with 1/T folded in
    dps = diag * pos                      # diag correction on positives only

    col = lambda v: v.reshape(Bp, 1)
    row = lambda v: v.reshape(1, Bp)
    ins = (image_features, text_features,
           col(dps), col(pos), col(negs),
           row(dps), row(pos), row(negs))

    if resident:
        kernel = _resident_kernel
        grid = (n_rt,)
        in_specs = [
            pl.BlockSpec((tq, D), lambda qi: (qi, 0)),       # image row tile
            pl.BlockSpec((Bp, D), lambda qi: (0, 0)),        # resident text block
            pl.BlockSpec((tq, 1), lambda qi: (qi, 0)),       # diag*pos   (rows)
            pl.BlockSpec((tq, 1), lambda qi: (qi, 0)),       # pos        (rows)
            pl.BlockSpec((tq, 1), lambda qi: (qi, 0)),       # neg/T      (rows)
            pl.BlockSpec((1, Bp), lambda qi: (0, 0)),        # diag*pos   (cols)
            pl.BlockSpec((1, Bp), lambda qi: (0, 0)),        # pos        (cols)
            pl.BlockSpec((1, Bp), lambda qi: (0, 0)),        # neg/T      (cols)
        ]
        out_specs = [
            pl.BlockSpec((tq, 1), lambda qi: (qi, 0)),
            pl.BlockSpec((tq, 1), lambda qi: (qi, 0)),
            pl.BlockSpec((1, 1, Bp), lambda qi: (qi, 0, 0)),
            pl.BlockSpec((1, 1, Bp), lambda qi: (qi, 0, 0)),
        ]
        dim_sem = ("parallel",)
        txt_reads = 1
    else:
        kernel = _stream_kernel
        grid = (n_rt, n_ct)
        in_specs = [
            pl.BlockSpec((tq, D), lambda qi, ki: (qi, 0)),
            pl.BlockSpec((tk, D), lambda qi, ki: (ki, 0)),
            pl.BlockSpec((tq, 1), lambda qi, ki: (qi, 0)),
            pl.BlockSpec((tq, 1), lambda qi, ki: (qi, 0)),
            pl.BlockSpec((tq, 1), lambda qi, ki: (qi, 0)),
            pl.BlockSpec((1, tk), lambda qi, ki: (0, ki)),
            pl.BlockSpec((1, tk), lambda qi, ki: (0, ki)),
            pl.BlockSpec((1, tk), lambda qi, ki: (0, ki)),
        ]
        out_specs = [
            pl.BlockSpec((tq, 1), lambda qi, ki: (qi, 0)),           # A accum
            pl.BlockSpec((tq, 1), lambda qi, ki: (qi, 0)),           # B accum
            pl.BlockSpec((1, 1, tk), lambda qi, ki: (qi, 0, ki)),    # C partial
            pl.BlockSpec((1, 1, tk), lambda qi, ki: (qi, 0, ki)),    # D partial
        ]
        dim_sem = ("parallel", "arbitrary")
        txt_reads = n_rt

    out_shape = (
        jax.ShapeDtypeStruct((Bp, 1), f32),
        jax.ShapeDtypeStruct((Bp, 1), f32),
        jax.ShapeDtypeStruct((n_rt, 1, Bp), f32),
        jax.ShapeDtypeStruct((n_rt, 1, Bp), f32),
    )

    cost = pl.CostEstimate(
        flops=int(2 * Bp * Bp * D + 8 * Bp * Bp),
        transcendentals=int(Bp * Bp),
        bytes_accessed=int((1 + txt_reads) * Bp * D * esz + 16 * Bp * 4))

    # double-buffered inputs + ~8 live (tq, tk) f32 temps
    vmem_est = 2 * (tq + tk) * D * esz + 8 * tq * tk * 4 + 64 * 1024
    cparams_kwargs = dict(dimension_semantics=dim_sem)
    if vmem_est > 32 * 1024 * 1024:
        # leave headroom but stay inside v7x's 64 MiB physical VMEM
        cparams_kwargs["vmem_limit_bytes"] = int(min(vmem_est * 1.25,
                                                     60 * 1024 * 1024))

    a_sum, b_sum, c_part, d_part = pl.pallas_call(
        kernel,
        grid=grid,
        in_specs=in_specs,
        out_specs=out_specs,
        out_shape=out_shape,
        compiler_params=pltpu.CompilerParams(**cparams_kwargs),
        cost_estimate=cost,
    )(*ins)

    t = f32(TEMPERATURE)
    a_vec = a_sum[:B, 0] * t
    b_vec = b_sum[:B, 0] * t
    c_vec = jnp.sum(c_part, axis=0).reshape(-1)[:B] * t
    d_vec = jnp.sum(d_part, axis=0).reshape(-1)[:B] * t
    return a_vec, b_vec, c_vec, d_vec


# -----------------------------------------------------------------------------
# Full forward: Pallas contrastive term + O(B) finalization + penalty term.
# -----------------------------------------------------------------------------
def sogclr_penalty_forward(image_features, text_features, image_ids, text_ids,
                           slabel, epoch, img_feas_c, txt_feas_c, labels_c,
                           index_c, last_loss_c, s_I_buf, s_T_buf, u_buf,
                           *, force_stream=False, row_tile=None, col_tile=None):
    del index_c  # unused in the reference module as well
    f32 = jnp.float32
    B, _ = image_features.shape
    C = NUM_CT_CLASS

    pos = (slabel.reshape(-1) == 1).astype(f32)                      # (B,)
    # diag(sim) as a row-wise dot; the kernel never builds (B,B) diag masks.
    diag = jnp.sum(image_features.astype(f32) * text_features.astype(f32),
                   axis=1)

    a_vec, b_vec, c_vec, d_vec = _contrastive_sums(
        image_features, text_features, pos, diag,
        force_stream=force_stream, row_tile=row_tile, col_tile=col_tile)

    # Precondition (same as the reference module): the batch must contain at
    # least one positive and one negative, otherwise the result is NaN.
    n_pos = jnp.sum(pos)
    n_neg = f32(B) - n_pos

    g_I = a_vec / n_neg
    g_T = c_vec / n_neg

    sI_prev = s_I_buf[image_ids].astype(f32)
    sT_prev = s_T_buf[text_ids].astype(f32)
    is_first = jnp.asarray(epoch, jnp.int32) == 0
    s_I = jnp.where(is_first, g_I, (1.0 - GAMMA1) * sI_prev + GAMMA1 * g_I)
    s_T = jnp.where(is_first, g_T, (1.0 - GAMMA1) * sT_prev + GAMMA1 * g_T)

    image_loss = b_vec / (n_neg * (s_I + EPS))       # per positive row
    text_loss = d_vec / (n_neg * (s_T + EPS))        # per positive col
    contrastive_loss = (jnp.sum(image_loss * pos) +
                        jnp.sum(text_loss * pos)) / n_pos

    # ---------------- constraint (penalty) term: tiny (Bc x C) problem in XLA
    if COSINE:
        epoch_f = jnp.asarray(epoch, f32)
        beta = BETA * 0.5 * (1.0 + jnp.cos(math.pi + math.pi *
                                           (epoch_f + 1.0) / TOTAL_EPOCH))
    else:
        beta = f32(BETA)

    logits = (img_feas_c.astype(f32) @ txt_feas_c.astype(f32).T) / TAU  # (Bc,C)
    m = jnp.max(logits, axis=1, keepdims=True)
    lse = (m + jnp.log(jnp.sum(jnp.exp(logits - m), axis=1, keepdims=True)))[:, 0]
    onehot = jax.nn.one_hot(labels_c, C, dtype=f32)                     # (Bc,C)
    picked = jnp.sum(logits * onehot, axis=1)
    ce = lse - picked                                                   # (Bc,)

    count = jnp.sum(onehot, axis=0)                                     # (C,)
    sum_ce = jnp.sum(onehot * ce[:, None], axis=0)
    sum_last = jnp.sum(onehot * last_loss_c.astype(f32)[:, None], axis=0)
    present = (count > 0.0).astype(f32)
    safe_count = jnp.where(count > 0.0, count, 1.0)
    mean_ce = sum_ce / safe_count
    mean_last = sum_last / safe_count
    cv = mean_ce - mean_last

    u_old = u_buf.astype(f32)
    u_sum_present = jnp.sum(u_old * present)
    ema = (1.0 - GAMMA2) * u_old + GAMMA2 * cv
    u_upd = jnp.where(u_sum_present == 0.0, cv, ema)
    u_new = jnp.where(present > 0.0, u_upd, u_old)

    closs = jnp.maximum(beta * u_new, 0.0) * mean_ce * TAU
    constraint_loss = jnp.sum(closs * present) / jnp.sum(present)

    # ------- functional stand-ins for the module's buffer side-effects -------
    pos_b = pos > 0
    s_I_buf = s_I_buf.at[image_ids].set(
        jnp.where(pos_b, s_I, s_I_buf[image_ids]))
    s_T_buf = s_T_buf.at[text_ids].set(
        jnp.where(pos_b, s_T, s_T_buf[text_ids]))
    u_buf = u_new

    total_loss = contrastive_loss + constraint_loss
    return total_loss, s_I_buf, s_T_buf, u_buf


# -----------------------------------------------------------------------------
# Pure-numpy reference mirroring the PyTorch forward (epoch == 0, u == 0 path).
# -----------------------------------------------------------------------------
def reference_forward_np(image_features, text_features, slabel,
                         img_feas_c, txt_feas_c, labels_c, last_loss_c):
    img = np.asarray(image_features, np.float32)
    txt = np.asarray(text_features, np.float32)
    sim = img @ txt.T
    diag = np.diag(sim)
    pos_mask = (np.asarray(slabel).reshape(-1) == 1)
    neg_mask = ~pos_mask
    image_diffs = (sim - diag[:, None])[pos_mask][:, neg_mask]
    text_diffs = (sim - diag[None, :])[neg_mask][:, pos_mask]
    if ENABLE_SURROGATE:
        image_diffs = np.maximum(image_diffs + SURROGATE_C, 0.0) ** 2
        text_diffs = np.maximum(text_diffs + SURROGATE_C, 0.0) ** 2
    exp_i = np.exp(image_diffs / TEMPERATURE)
    exp_t = np.exp(text_diffs / TEMPERATURE)
    g_I = exp_i.mean(axis=1, keepdims=True)
    g_T = exp_t.mean(axis=0, keepdims=True)
    s_I, s_T = g_I, g_T  # epoch == 0
    w_i = exp_i / (s_I + EPS)
    w_t = exp_t / (s_T + EPS)
    contrastive = (w_i * image_diffs).mean(axis=1).mean() + \
                  (w_t * text_diffs).mean(axis=0).mean()

    labels_np = np.asarray(labels_c)
    logits = (1.0 / TAU) * np.asarray(img_feas_c, np.float32) @ \
             np.asarray(txt_feas_c, np.float32).T
    m = logits.max(axis=1, keepdims=True)
    lse = (m + np.log(np.exp(logits - m).sum(axis=1, keepdims=True))).reshape(-1)
    ce = lse - logits[np.arange(logits.shape[0]), labels_np]
    uniq, counts = np.unique(labels_np, return_counts=True)
    sum_by = np.zeros(NUM_CT_CLASS, np.float32)
    np.add.at(sum_by, labels_np, ce)
    sum_last = np.zeros(NUM_CT_CLASS, np.float32)
    np.add.at(sum_last, labels_np, np.asarray(last_loss_c, np.float32))
    mean_by = sum_by[uniq] / counts.astype(np.float32)
    mean_last = sum_last[uniq] / counts.astype(np.float32)
    cv = mean_by - mean_last
    u = np.zeros(NUM_CT_CLASS, np.float32)
    u[uniq] = cv  # u starts at zero -> init branch
    closs = np.maximum(BETA * u[uniq], 0.0) * mean_by * TAU
    return contrastive + closs.mean()


if __name__ == "__main__":
    key = jax.random.PRNGKey(0)
    kI, kT, kIc, kTc, kL, kI2, kT2, kL2 = jax.random.split(key, 8)

    C = NUM_CT_CLASS

    # -------------- test 1: small batch -> resident-text 1-D grid path -------
    B, D = 8, 32
    Bc, Dc = 8, 16
    image_features = jax.random.normal(kI, (B, D), dtype=jnp.float32) * 0.2
    text_features = jax.random.normal(kT, (B, D), dtype=jnp.float32) * 0.2
    image_ids = jnp.arange(B, dtype=jnp.int32) * 3 % N_BUFFER
    text_ids = jnp.arange(B, dtype=jnp.int32) * 5 % N_BUFFER
    slabel = jnp.array([[1], [1], [1], [1], [0], [0], [0], [0]], dtype=jnp.int32)
    epoch = 0
    img_feas_c = jax.random.normal(kIc, (Bc, Dc), dtype=jnp.float32) * 0.3
    txt_feas_c = jax.random.normal(kTc, (C, Dc), dtype=jnp.float32) * 0.3
    labels_c = jnp.array([0, 1, 2, 1, 0, 3, 4, 2], dtype=jnp.int32)
    index_c = jnp.arange(Bc, dtype=jnp.int32)
    last_loss_c = jax.random.uniform(kL, (Bc,), dtype=jnp.float32)

    s_I_buf = jnp.zeros((N_BUFFER,), jnp.float32)
    s_T_buf = jnp.zeros((N_BUFFER,), jnp.float32)
    u_buf = jnp.zeros((C,), jnp.float32)

    loss, _, _, _ = sogclr_penalty_forward(
        image_features, text_features, image_ids, text_ids, slabel, epoch,
        img_feas_c, txt_feas_c, labels_c, index_c, last_loss_c,
        s_I_buf, s_T_buf, u_buf)
    loss = jax.block_until_ready(loss)

    ref = reference_forward_np(image_features, text_features, slabel,
                               img_feas_c, txt_feas_c, labels_c, last_loss_c)
    np.testing.assert_allclose(np.asarray(loss), np.float32(ref),
                               rtol=2e-3, atol=2e-3)

    # -------- test 2: non-multiple batch, forced streamed 2-D grid path ------
    B2, D2 = 200, 32          # B2 not a tile multiple -> exercises padding
    img2 = jax.random.normal(kI2, (B2, D2), dtype=jnp.float32) * 0.1
    txt2 = jax.random.normal(kT2, (B2, D2), dtype=jnp.float32) * 0.1
    ids2 = jnp.arange(B2, dtype=jnp.int32)
    slabel2 = (jnp.arange(B2) % 2).astype(jnp.int32).reshape(B2, 1)
    last_loss2 = jax.random.uniform(kL2, (Bc,), dtype=jnp.float32)

    loss2, _, _, _ = sogclr_penalty_forward(
        img2, txt2, ids2, ids2, slabel2, 0,
        img_feas_c, txt_feas_c, labels_c, index_c, last_loss2,
        s_I_buf, s_T_buf, u_buf,
        force_stream=True, row_tile=128, col_tile=128)
    loss2 = jax.block_until_ready(loss2)

    ref2 = reference_forward_np(img2, txt2, slabel2,
                                img_feas_c, txt_feas_c, labels_c, last_loss2)
    np.testing.assert_allclose(np.asarray(loss2), np.float32(ref2),
                               rtol=2e-3, atol=2e-3)

    print("KERNEL_OK")
</pallas_src>

<mosaic_0001>
module attributes {stable_mosaic.version = 11 : i64} {
  func.func @_resident_kernel(%arg0: i32, %arg1: memref<8x32xf32, #tpu.memory_space<vmem>>, %arg2: memref<8x32xf32, #tpu.memory_space<vmem>>, %arg3: memref<8x1xf32, #tpu.memory_space<vmem>>, %arg4: memref<8x1xf32, #tpu.memory_space<vmem>>, %arg5: memref<8x1xf32, #tpu.memory_space<vmem>>, %arg6: memref<1x8xf32, #tpu.memory_space<vmem>>, %arg7: memref<1x8xf32, #tpu.memory_space<vmem>>, %arg8: memref<1x8xf32, #tpu.memory_space<vmem>>, %arg9: memref<8x1xf32, #tpu.memory_space<vmem>>, %arg10: memref<8x1xf32, #tpu.memory_space<vmem>>, %arg11: memref<1x1x8xf32, #tpu.memory_space<vmem>>, %arg12: memref<1x1x8xf32, #tpu.memory_space<vmem>>) attributes {dimension_semantics = [#tpu.dimension_semantics<parallel>], iteration_bounds = array<i64: 1>, scalar_prefetch = 0 : i64, scratch_operands = 0 : i64, tpu.core_type = #tpu.core_type<tc>, window_params = [{transform_indices = @transform_0, window_bounds = array<i64: 8, 32>}, {pipeline_mode = #tpu.pipeline_mode<synchronous>, transform_indices = @transform_1, window_bounds = array<i64: 8, 32>}, {transform_indices = @transform_2, window_bounds = array<i64: 8, 1>}, {transform_indices = @transform_3, window_bounds = array<i64: 8, 1>}, {transform_indices = @transform_4, window_bounds = array<i64: 8, 1>}, {pipeline_mode = #tpu.pipeline_mode<synchronous>, transform_indices = @transform_5, window_bounds = array<i64: 1, 8>}, {pipeline_mode = #tpu.pipeline_mode<synchronous>, transform_indices = @transform_6, window_bounds = array<i64: 1, 8>}, {pipeline_mode = #tpu.pipeline_mode<synchronous>, transform_indices = @transform_7, window_bounds = array<i64: 1, 8>}, {transform_indices = @transform_8, window_bounds = array<i64: 8, 1>}, {transform_indices = @transform_9, window_bounds = array<i64: 8, 1>}, {transform_indices = @transform_10, window_bounds = array<i64: 1, 1, 8>}, {transform_indices = @transform_11, window_bounds = array<i64: 1, 1, 8>}]} {
    %c0 = arith.constant 0 : index
    %c0_0 = arith.constant 0 : index
    %0 = vector.load %arg1[%c0, %c0_0] : memref<8x32xf32, #tpu.memory_space<vmem>>, vector<8x32xf32>
    %c0_1 = arith.constant 0 : index
    %c0_2 = arith.constant 0 : index
    %1 = vector.load %arg2[%c0_1, %c0_2] : memref<8x32xf32, #tpu.memory_space<vmem>>, vector<8x32xf32>
    %cst = arith.constant dense<0.000000e+00> : vector<8x8xf32>
    %2 = tpu.matmul %0, %1, %cst {dimension_numbers = #tpu.dot_dimension_numbers<[1], [1], [0], [0], [0, 0, 1, 0], [], []>} : vector<8x32xf32>, vector<8x32xf32>, vector<8x8xf32> -> vector<8x8xf32>
    %c0_3 = arith.constant 0 : index
    %c0_4 = arith.constant 0 : index
    %3 = vector.load %arg3[%c0_3, %c0_4] : memref<8x1xf32, #tpu.memory_space<vmem>>, vector<8x1xf32>
    %c0_5 = arith.constant 0 : index
    %c0_6 = arith.constant 0 : index
    %4 = vector.load %arg4[%c0_5, %c0_6] : memref<8x1xf32, #tpu.memory_space<vmem>>, vector<8x1xf32>
    %c0_7 = arith.constant 0 : index
    %c0_8 = arith.constant 0 : index
    %5 = vector.load %arg5[%c0_7, %c0_8] : memref<8x1xf32, #tpu.memory_space<vmem>>, vector<8x1xf32>
    %c0_9 = arith.constant 0 : index
    %c0_10 = arith.constant 0 : index
    %6 = vector.load %arg6[%c0_9, %c0_10] : memref<1x8xf32, #tpu.memory_space<vmem>>, vector<1x8xf32>
    %c0_11 = arith.constant 0 : index
    %c0_12 = arith.constant 0 : index
    %7 = vector.load %arg7[%c0_11, %c0_12] : memref<1x8xf32, #tpu.memory_space<vmem>>, vector<1x8xf32>
    %c0_13 = arith.constant 0 : index
    %c0_14 = arith.constant 0 : index
    %8 = vector.load %arg8[%c0_13, %c0_14] : memref<1x8xf32, #tpu.memory_space<vmem>>, vector<1x8xf32>
    %9 = vector.broadcast %4 : vector<8x1xf32> to vector<8x8xf32>
    %10 = vector.broadcast %8 : vector<1x8xf32> to vector<8x8xf32>
    %11 = arith.mulf %9, %10 : vector<8x8xf32>
    %12 = vector.broadcast %5 : vector<8x1xf32> to vector<8x8xf32>
    %13 = vector.broadcast %7 : vector<1x8xf32> to vector<8x8xf32>
    %14 = arith.mulf %12, %13 : vector<8x8xf32>
    %15 = arith.addf %11, %14 : vector<8x8xf32>
    %16 = vector.broadcast %3 : vector<8x1xf32> to vector<8x8xf32>
    %17 = arith.subf %2, %16 : vector<8x8xf32>
    %18 = vector.broadcast %6 : vector<1x8xf32> to vector<8x8xf32>
    %19 = arith.subf %17, %18 : vector<8x8xf32>
    %20 = arith.mulf %19, %15 : vector<8x8xf32>
    %21 = math.exp %20 : vector<8x8xf32>
    %22 = arith.mulf %21, %15 : vector<8x8xf32>
    %23 = arith.mulf %21, %20 : vector<8x8xf32>
    %cst_15 = arith.constant dense<0.000000e+00> : vector<8xf32>
    %24 = vector.multi_reduction <add>, %22, %cst_15 [1] : vector<8x8xf32> to vector<8xf32>
    %25 = vector.shape_cast %24 : vector<8xf32> to vector<8x1xf32>
    %cst_16 = arith.constant dense<0.000000e+00> : vector<8xf32>
    %26 = vector.multi_reduction <add>, %23, %cst_16 [1] : vector<8x8xf32> to vector<8xf32>
    %27 = vector.shape_cast %26 : vector<8xf32> to vector<8x1xf32>
    %cst_17 = arith.constant dense<0.000000e+00> : vector<8xf32>
    %28 = vector.multi_reduction <add>, %22, %cst_17 [0] : vector<8x8xf32> to vector<8xf32>
    %29 = vector.shape_cast %28 : vector<8xf32> to vector<1x8xf32>
    %cst_18 = arith.constant dense<0.000000e+00> : vector<8xf32>
    %30 = vector.multi_reduction <add>, %23, %cst_18 [0] : vector<8x8xf32> to vector<8xf32>
    %31 = vector.shape_cast %30 : vector<8xf32> to vector<1x8xf32>
    %c0_19 = arith.constant 0 : index
    %c0_20 = arith.constant 0 : index
    %32 = vector.load %arg9[%c0_19, %c0_20] : memref<8x1xf32, #tpu.memory_space<vmem>>, vector<8x1xf32>
    tpu.vector_store %arg9[%c0_19, %c0_20], %25 {strides = array<i32>} : memref<8x1xf32, #tpu.memory_space<vmem>>, vector<8x1xf32>,
    %c0_21 = arith.constant 0 : index
    %c0_22 = arith.constant 0 : index
    %33 = vector.load %arg10[%c0_21, %c0_22] : memref<8x1xf32, #tpu.memory_space<vmem>>, vector<8x1xf32>
    tpu.vector_store %arg10[%c0_21, %c0_22], %27 {strides = array<i32>} : memref<8x1xf32, #tpu.memory_space<vmem>>, vector<8x1xf32>,
    %34 = vector.shape_cast %29 : vector<1x8xf32> to vector<1x1x8xf32>
    %c0_23 = arith.constant 0 : index
    %c0_24 = arith.constant 0 : index
    %c0_25 = arith.constant 0 : index
    %35 = vector.load %arg11[%c0_23, %c0_24, %c0_25] : memref<1x1x8xf32, #tpu.memory_space<vmem>>, vector<1x1x8xf32>
    tpu.vector_store %arg11[%c0_23, %c0_24, %c0_25], %34 {strides = array<i32>} : memref<1x1x8xf32, #tpu.memory_space<vmem>>, vector<1x1x8xf32>,
    %36 = vector.shape_cast %31 : vector<1x8xf32> to vector<1x1x8xf32>
    %c0_26 = arith.constant 0 : index
    %c0_27 = arith.constant 0 : index
    %c0_28 = arith.constant 0 : index
    %37 = vector.load %arg12[%c0_26, %c0_27, %c0_28] : memref<1x1x8xf32, #tpu.memory_space<vmem>>, vector<1x1x8xf32>
    tpu.vector_store %arg12[%c0_26, %c0_27, %c0_28], %36 {strides = array<i32>} : memref<1x1x8xf32, #tpu.memory_space<vmem>>, vector<1x1x8xf32>,
    return
  }
  func.func @transform_0(%arg0: i32) -> (i32, i32) {
    %c0_i32 = arith.constant 0 : i32
    %c0_i32_0 = arith.constant 0 : i32
    return %arg0, %c0_i32 : i32, i32
  }
  func.func @transform_1(%arg0: i32) -> (i32, i32) {
    %c0_i32 = arith.constant 0 : i32
    %c0_i32_0 = arith.constant 0 : i32
    %c0_i32_1 = arith.constant 0 : i32
    return %c0_i32, %c0_i32_0 : i32, i32
  }
  func.func @transform_2(%arg0: i32) -> (i32, i32) {
    %c0_i32 = arith.constant 0 : i32
    %c0_i32_0 = arith.constant 0 : i32
    return %arg0, %c0_i32 : i32, i32
  }
  func.func @transform_3(%arg0: i32) -> (i32, i32) {
    %c0_i32 = arith.constant 0 : i32
    %c0_i32_0 = arith.constant 0 : i32
    return %arg0, %c0_i32 : i32, i32
  }
  func.func @transform_4(%arg0: i32) -> (i32, i32) {
    %c0_i32 = arith.constant 0 : i32
    %c0_i32_0 = arith.constant 0 : i32
    return %arg0, %c0_i32 : i32, i32
  }
  func.func @transform_5(%arg0: i32) -> (i32, i32) {
    %c0_i32 = arith.constant 0 : i32
    %c0_i32_0 = arith.constant 0 : i32
    %c0_i32_1 = arith.constant 0 : i32
    return %c0_i32, %c0_i32_0 : i32, i32
  }
  func.func @transform_6(%arg0: i32) -> (i32, i32) {
    %c0_i32 = arith.constant 0 : i32
    %c0_i32_0 = arith.constant 0 : i32
    %c0_i32_1 = arith.constant 0 : i32
    return %c0_i32, %c0_i32_0 : i32, i32
  }
  func.func @transform_7(%arg0: i32) -> (i32, i32) {
    %c0_i32 = arith.constant 0 : i32
    %c0_i32_0 = arith.constant 0 : i32
    %c0_i32_1 = arith.constant 0 : i32
    return %c0_i32, %c0_i32_0 : i32, i32
  }
  func.func @transform_8(%arg0: i32) -> (i32, i32) {
    %c0_i32 = arith.constant 0 : i32
    %c0_i32_0 = arith.constant 0 : i32
    return %arg0, %c0_i32 : i32, i32
  }
  func.func @transform_9(%arg0: i32) -> (i32, i32) {
    %c0_i32 = arith.constant 0 : i32
    %c0_i32_0 = arith.constant 0 : i32
    return %arg0, %c0_i32 : i32, i32
  }
  func.func @transform_10(%arg0: i32) -> (i32, i32, i32) {
    %c0_i32 = arith.constant 0 : i32
    %c0_i32_0 = arith.constant 0 : i32
    %c0_i32_1 = arith.constant 0 : i32
    return %arg0, %c0_i32, %c0_i32_0 : i32, i32, i32
  }
  func.func @transform_11(%arg0: i32) -> (i32, i32, i32) {
    %c0_i32 = arith.constant 0 : i32
    %c0_i32_0 = arith.constant 0 : i32
    %c0_i32_1 = arith.constant 0 : i32
    return %arg0, %c0_i32, %c0_i32_0 : i32, i32, i32
  }
}

</mosaic_0001>

<llo_original>
// kernel: tpu_custom_call.1
$region0: #{tpu_custom_call.1}
  #allocation0 [shape = 'u32[]', space=smem, size = 0x4, offset = 0x4, fixed_abs, tag = 'smem constant byte address 0x4 - core index']
  #allocation1 [shape = 'u32[144,128]{1,0:T(1,128)}', space=vmem, size = 0x12000, scoped, tag = 'internal scratch']
  %s0 = inlined_call_operand.vmem [shape: f32[8,32], index: 0, kind: input, shape index: {}]
  %s1 = inlined_call_operand.vmem [shape: f32[8,32], index: 1, kind: input, shape index: {}]
  %s2 = inlined_call_operand.vmem [shape: f32[8,1], index: 2, kind: input, shape index: {}]
  %s3 = inlined_call_operand.vmem [shape: f32[8,1], index: 3, kind: input, shape index: {}]
  %s4 = inlined_call_operand.vmem [shape: f32[8,1], index: 4, kind: input, shape index: {}]
  %s5 = inlined_call_operand.vmem [shape: f32[1,8], index: 5, kind: input, shape index: {}]
  %s6 = inlined_call_operand.vmem [shape: f32[1,8], index: 6, kind: input, shape index: {}]
  %s7 = inlined_call_operand.vmem [shape: f32[1,8], index: 7, kind: input, shape index: {}]
  %s8 = inlined_call_operand.vmem [shape: f32[8,1], index: 8, kind: output, shape index: {0}]
  %s9 = inlined_call_operand.vmem [shape: f32[8,1], index: 9, kind: output, shape index: {1}]
  %s10 = inlined_call_operand.hbm [shape: f32[1,1,8], index: 10, kind: output, shape index: {2}]
  %s11 = inlined_call_operand.hbm [shape: f32[1,1,8], index: 11, kind: output, shape index: {3}]
  %12 = xla_tuple %s8, %s9, %s10, %s11
  %s13 = sld [smem:[#allocation0]]
  $region66: #{tpu_custom_call.1} parent=0
    _
  %s15 = ssub.s32 1, %s13
  %s16 = scalar_select 0, %s15, %s13
  $region1: #{tpu_custom_call.1} parent=0
    #allocation2 [shape = 'u8[512]{0}', space=vmem, size = 0x400, scoped, tag = 'output window, operand 2, single buffered']
    #allocation3 [shape = 's32[1]{0}', space=sflag, size = 0x4, scoped, tag = 'scoped memory for tpu_custom_call.1']
    #allocation4 [shape = 'u8[512]{0}', space=vmem, size = 0x400, scoped, tag = 'output window, operand 3, single buffered']
    #allocation5 [shape = 's32[1]{0}', space=sflag, size = 0x4, scoped, tag = 'scoped memory for tpu_custom_call.1']
    %17 = vsyncpa [#allocation3], 0
    %18 = vsyncpa [#allocation5], 0
    // Predicated region
    $region2: #{tpu_custom_call.1} parent=1 // pred_check
      _
    $region3: #{tpu_custom_call.1} parent=1 // pred_check_branch
      %20 = sbr.rel (0) target = $region5
    $region4: #{tpu_custom_call.1} parent=1 // pred_region
      _
    $region5: #{tpu_custom_call.1} parent=1 // pred_fallthru
      _
    // Predicated region
    $region6: #{tpu_custom_call.1} parent=1 // pred_check
      _
    $region7: #{tpu_custom_call.1} parent=1 // pred_check_branch
      %22 = sbr.rel (0) target = $region9
    $region8: #{tpu_custom_call.1} parent=1 // pred_region
      _
    $region9: #{tpu_custom_call.1} parent=1 // pred_fallthru
      _
    // Predicated region
    $region10: #{tpu_custom_call.1} parent=1 // pred_check
      _
    $region11: #{tpu_custom_call.1} parent=1 // pred_check_branch
      %24 = sbr.rel (0) target = $region13
    $region12: #{tpu_custom_call.1} parent=1 // pred_region
      _
    $region13: #{tpu_custom_call.1} parent=1 // pred_fallthru
      _
    // Predicated region
    $region14: #{tpu_custom_call.1} parent=1 // pred_check
      _
    $region15: #{tpu_custom_call.1} parent=1 // pred_check_branch
      %26 = sbr.rel (0) target = $region17
    $region16: #{tpu_custom_call.1} parent=1 // pred_region
      _
    $region17: #{tpu_custom_call.1} parent=1 // pred_fallthru
      _
    // Predicated region
    $region18: #{tpu_custom_call.1} parent=1 // pred_check
      _
    $region19: #{tpu_custom_call.1} parent=1 // pred_check_branch
      %28 = sbr.rel (0) target = $region21
    $region20: #{tpu_custom_call.1} parent=1 // pred_region
      _
    $region21: #{tpu_custom_call.1} parent=1 // pred_fallthru
      _
    // Predicated region
    $region22: #{tpu_custom_call.1} parent=1 // pred_check
      _
    $region23: #{tpu_custom_call.1} parent=1 // pred_check_branch
      %30 = sbr.rel (0) target = $region25
    $region24: #{tpu_custom_call.1} parent=1 // pred_region
      _
    $region25: #{tpu_custom_call.1} parent=1 // pred_fallthru
      _
    // Predicated region
    $region26: #{tpu_custom_call.1} parent=1 // pred_check
      _
    $region27: #{tpu_custom_call.1} parent=1 // pred_check_branch
      %32 = sbr.rel (0) target = $region29
    $region28: #{tpu_custom_call.1} parent=1 // pred_region
      _
    $region29: #{tpu_custom_call.1} parent=1 // pred_fallthru
      _
    // Predicated region
    $region30: #{tpu_custom_call.1} parent=1 // pred_check
      _
    $region31: #{tpu_custom_call.1} parent=1 // pred_check_branch
      %34 = sbr.rel (0) target = $region33
    $region32: #{tpu_custom_call.1} parent=1 // pred_region
      _
    $region33: #{tpu_custom_call.1} parent=1 // pred_fallthru
      _
    %v35 = vld [vmem:[%s0] sm:$0xff]
    %v36 = vld [vmem:[%s1] sm:$0xff]
    %vm37 = vcmask 261120
    %v39 = vsel %vm37, %v35, 0
    %v42 = vsel %vm37, %v36, 0
    %44 = vmatprep.subr.mxu0 0.0
    %45 = vmatpush1.xpose.msra.mxu0 0.0
    %46 = vmatprep.subr.mxu0 0.0
    %47 = vmatpush1.xpose.msra.mxu0 0.0
    %48 = vmatprep.subr.mxu0 0.0
    %49 = vmatpush1.xpose.msra.mxu0 0.0
    %50 = vmatprep.subr.mxu0 0.0
    %51 = vmatpush1.xpose.msra.mxu0 0.0
    %52 = vmatprep.subr.mxu0 0.0
    %53 = vmatpush1.xpose.msra.mxu0 0.0
    %54 = vmatprep.subr.mxu0 0.0
    %55 = vmatpush1.xpose.msra.mxu0 0.0
    %56 = vmatprep.subr.mxu0 0.0
    %57 = vmatpush1.xpose.msra.mxu0 0.0
    %58 = vmatprep.subr.mxu0 0.0
    %59 = vmatpush1.xpose.msra.mxu0 0.0
    %60 = vmatprep.subr.mxu0 0.0
    %61 = vmatpush1.xpose.msra.mxu0 0.0
    %62 = vmatprep.subr.mxu0 0.0
    %63 = vmatpush1.xpose.msra.mxu0 0.0
    %64 = vmatprep.subr.mxu0 0.0
    %65 = vmatpush1.xpose.msra.mxu0 0.0
    %66 = vmatprep.subr.mxu0 0.0
    %67 = vmatpush1.xpose.msra.mxu0 0.0
    %68 = vmatprep.subr.mxu0 0.0
    %69 = vmatpush1.xpose.msra.mxu0 0.0
    %70 = vmatprep.subr.mxu0 0.0
    %71 = vmatpush1.xpose.msra.mxu0 0.0
    %72 = vmatprep.subr.mxu0 0.0
    %73 = vmatpush1.xpose.msra.mxu0 0.0
    %74 = vmatprep.subr.mxu0 0.0
    %75 = vmatpush1.xpose.msra.mxu0 %v42
    %76 = vmatprep.subr.mxu0 0.0
    %77 = vmatpush2.xpose.msra.mxu0 0.0
    %78 = vmatprep.subr.mxu0 0.0
    %79 = vmatpush2.xpose.msra.mxu0 0.0
    %80 = vmatprep.subr.mxu0 0.0
    %81 = vmatpush2.xpose.msra.mxu0 0.0
    %82 = vmatprep.subr.mxu0 0.0
    %83 = vmatpush2.xpose.msra.mxu0 0.0
    %84 = vmatprep.subr.mxu0 0.0
    %85 = vmatpush2.xpose.msra.mxu0 0.0
    %86 = vmatprep.subr.mxu0 0.0
    %87 = vmatpush2.xpose.msra.mxu0 0.0
    %88 = vmatprep.subr.mxu0 0.0
    %89 = vmatpush2.xpose.msra.mxu0 0.0
    %90 = vmatprep.subr.mxu0 0.0
    %91 = vmatpush2.xpose.msra.mxu0 0.0
    %92 = vmatprep.subr.mxu0 0.0
    %93 = vmatpush2.xpose.msra.mxu0 0.0
    %94 = vmatprep.subr.mxu0 0.0
    %95 = vmatpush2.xpose.msra.mxu0 0.0
    %96 = vmatprep.subr.mxu0 0.0
    %97 = vmatpush2.xpose.msra.mxu0 0.0
    %98 = vmatprep.subr.mxu0 0.0
    %99 = vmatpush2.xpose.msra.mxu0 0.0
    %100 = vmatprep.subr.mxu0 0.0
    %101 = vmatpush2.xpose.msra.mxu0 0.0
    %102 = vmatprep.subr.mxu0 0.0
    %103 = vmatpush2.xpose.msra.mxu0 0.0
    %104 = vmatprep.subr.mxu0 0.0
    %105 = vmatpush2.xpose.msra.mxu0 0.0
    %106 = vmatprep.subr.mxu0 0.0
    %107 = vmatpush2.xpose.msra.mxu0 0.0
    %108 = vmatprep.mubr.f32.mxu0 0.0
    %109 = vmatmul.mubr.f32.gmra.mxu0 %v39
    %v110 = vpop.f32.mrf.mxu0
    %v111 = vadd.f32 0.0, %v110
    %v112 = vpop.f32.mrf.mxu0
    %113 = vdwg.mxu0
    %v114 = vld [vmem:[%s2] sm:$0xff]
    %v115 = vld [vmem:[%s3] sm:$0xff]
    %v116 = vld [vmem:[%s4] sm:$0xff]
    %v117 = vld [vmem:[%s5] sm:$0x1]
    %v118 = vld [vmem:[%s6] sm:$0x1]
    %v119 = vld [vmem:[%s7] sm:$0x1]
    %121 = vset.pattern.permute.xlu0 0
    %122 = vperm.xlu0 %121, %v115
    %v123 = vpop.permute.xlu0 %122
    %v126 = vlaneseq
    %v127 = vshrl.u32 %v126, 7
    %v128 = vsub.s32 0, %v127
    %v129 = vrot.slane %v119, %v128
    %v131 = vmul.f32 %v123, %v129
    %133 = vset.pattern.permute.xlu0 0
    %134 = vperm.xlu0 %133, %v116
    %v135 = vpop.permute.xlu0 %134
    %v138 = vlaneseq
    %v139 = vshrl.u32 %v138, 7
    %v140 = vsub.s32 0, %v139
    %v141 = vrot.slane %v118, %v140
    %v143 = vmul.f32 %v135, %v141
    %v144 = vadd.f32 %v131, %v143
    %146 = vset.pattern.permute.xlu0 0
    %147 = vperm.xlu0 %146, %v114
    %v148 = vpop.permute.xlu0 %147
    %v150 = vsub.f32 %v111, %v148
    %v152 = vlaneseq
    %v153 = vshrl.u32 %v152, 7
    %v154 = vsub.s32 0, %v153
    %v155 = vrot.slane %v117, %v154
    %v157 = vsub.f32 %v150, %v155
    %v158 = vmul.f32 %v157, %v144
    %v159 = vmul.f32 %v158, 1.442695
    %v160 = vpow.pop %v159
    %v161 = vmul.f32 %v160, %v144
    %v162 = vmul.f32 %v160, %v158
    %vm163 = vcmask 64512
    %v164 = vsel %vm163, %v161, 0.0
    %165 = vadd.xlane.f32.xlu0 %v164
    %v166 = vpop.xlane.xlu0 %165
    %v167 = vsel %vm163, %v162, 0.0
    %168 = vadd.xlane.f32.xlu0 %v167
    %v169 = vpop.xlane.xlu0 %168
    %v170 = vrot.slane %v164, 4
    %v171 = vadd.f32 %v164, %v170
    %v172 = vrot.slane %v171, 2
    %v173 = vadd.f32 %v171, %v172
    %v174 = vrot.slane %v173, 1
    %v175 = vadd.f32 %v173, %v174
    %v176 = vrot.slane %v167, 4
    %v177 = vadd.f32 %v167, %v176
    %v178 = vrot.slane %v177, 2
    %v179 = vadd.f32 %v177, %v178
    %v180 = vrot.slane %v179, 1
    %v181 = vadd.f32 %v179, %v180
    %vm182 = vcmask 7168
    %183 = vst.msk [vmem:[%s8] sm:$0xff] %vm182, %v166
    %184 = vst.msk [vmem:[%s9] sm:$0xff] %vm182, %v169
    %vm185 = vcmask 57344
    %186 = vst.msk [vmem:[#allocation2] sm:$0x1] %vm185, %v175
    %187 = vst.msk [vmem:[#allocation4] sm:$0x1] %vm185, %v181
    // Predicated region
    $region34: #{tpu_custom_call.1} parent=1 // pred_check
      _
    $region35: #{tpu_custom_call.1} parent=1 // pred_check_branch
      %189 = sbr.rel (0) target = $region37
    $region36: #{tpu_custom_call.1} parent=1 // pred_region
      _
    $region37: #{tpu_custom_call.1} parent=1 // pred_fallthru
      _
    // Predicated region
    $region38: #{tpu_custom_call.1} parent=1 // pred_check
      _
    $region39: #{tpu_custom_call.1} parent=1 // pred_check_branch
      %191 = sbr.rel (0) target = $region41
    $region40: #{tpu_custom_call.1} parent=1 // pred_region
      _
    $region41: #{tpu_custom_call.1} parent=1 // pred_fallthru
      _
    // Predicated region
    $region42: #{tpu_custom_call.1} parent=1 // pred_check
      _
    $region43: #{tpu_custom_call.1} parent=1 // pred_check_branch
      %193 = sbr.rel (0) target = $region45
    $region44: #{tpu_custom_call.1} parent=1 // pred_region
      %s195 = ssub.s32 16, 16
      %196 = vsyncadd [#allocation3], %s195
      %s198 = sshll.u32 [#allocation2], 4
      %s199 = int_to_ptr.vmem [resolvable:$true] %s198
      %201 = dma.vmem_to_hbm [thread:$0]  %s199, 16, %s10, [#allocation3]
    $region45: #{tpu_custom_call.1} parent=1 // pred_fallthru
      _
    // Predicated region
    $region46: #{tpu_custom_call.1} parent=1 // pred_check
      _
    $region47: #{tpu_custom_call.1} parent=1 // pred_check_branch
      %203 = sbr.rel (0) target = $region49
    $region48: #{tpu_custom_call.1} parent=1 // pred_region
      %s205 = ssub.s32 16, 16
      %206 = vsyncadd [#allocation5], %s205
      %s208 = sshll.u32 [#allocation4], 4
      %s209 = int_to_ptr.vmem [resolvable:$true] %s208
      %211 = dma.vmem_to_hbm [thread:$0]  %s209, 16, %s11, [#allocation5]
    $region49: #{tpu_custom_call.1} parent=1 // pred_fallthru
      _
    // Predicated region
    $region50: #{tpu_custom_call.1} parent=1 // pred_check
      _
    $region51: #{tpu_custom_call.1} parent=1 // pred_check_branch
      %213 = sbr.rel (0) target = $region53
    $region52: #{tpu_custom_call.1} parent=1 // pred_region
      _
    $region53: #{tpu_custom_call.1} parent=1 // pred_fallthru
      _
    // Predicated region
    $region54: #{tpu_custom_call.1} parent=1 // pred_check
      _
    $region55: #{tpu_custom_call.1} parent=1 // pred_check_branch
      %215 = sbr.rel (0) target = $region57
    $region56: #{tpu_custom_call.1} parent=1 // pred_region
      _
    $region57: #{tpu_custom_call.1} parent=1 // pred_fallthru
      _
    // Predicated region
    $region58: #{tpu_custom_call.1} parent=1 // pred_check
      _
    $region59: #{tpu_custom_call.1} parent=1 // pred_check_branch
      %217 = sbr.rel (0) target = $region61
    $region60: #{tpu_custom_call.1} parent=1 // pred_region
      %218 = dma.done [#allocation3], 16
    $region61: #{tpu_custom_call.1} parent=1 // pred_fallthru
      _
    // Predicated region
    $region62: #{tpu_custom_call.1} parent=1 // pred_check
      _
    $region63: #{tpu_custom_call.1} parent=1 // pred_check_branch
      %220 = sbr.rel (0) target = $region65
    $region64: #{tpu_custom_call.1} parent=1 // pred_region
      %221 = dma.done [#allocation5], 16
    $region65: #{tpu_custom_call.1} parent=1 // pred_fallthru
      _
    %222 = vsyncpa [#allocation3], 1
    %223 = vsyncpa [#allocation5], 1

</llo_original>
